<compile_context>
chip_gen: v7x
topology: tpu7x:2x2x1
jax: 0.10.0
libtpu: 0.0.40
codegen_flags: <defaults>
</compile_context>

<pallas_src>
import functools

import jax
import jax.numpy as jnp
from jax.experimental import pallas as pl
from jax.experimental.pallas import tpu as pltpu

H1_PAD = 256   # 160 padded to 2*128
H2_PAD = 128   # 100 padded to 128


def _round_up(x, m):
    return (x + m - 1) // m * m


def _net4_kernel(x_ref, w1_ref, b1_ref, w2_ref, b2_ref, w3_ref, b3_ref, o_ref):
    # --- fc[0]: Linear(n_feature, 160) ---  (bf16 operands, f32 accumulate)
    h1 = jnp.dot(x_ref[...], w1_ref[...], preferred_element_type=jnp.float32)
    # fc[1]: Dropout(0.5) -> identity at inference; fc[2]: ReLU (f32 epilogue)
    h1 = jnp.maximum(h1 + b1_ref[...], 0.0)

    # --- fc[3]: Linear(160, 100) ---
    h2 = jnp.dot(h1.astype(jnp.bfloat16), w2_ref[...],
                 preferred_element_type=jnp.float32)
    # fc[4]: Dropout -> identity; fc[5]: ReLU
    h2 = jnp.maximum(h2 + b2_ref[...], 0.0)

    # --- fc[6]: Linear(100, n_output) ---  lane-dense (128-wide) store
    out = jnp.dot(h2.astype(jnp.bfloat16), w3_ref[...],
                  preferred_element_type=jnp.float32)
    o_ref[...] = out + b3_ref[...]


def prepare_params(params, n_feature):
    """Zero-pad weights/biases to lane-friendly shapes and cast weights to bf16."""
    w1, b1, w2, b2, w3, b3 = params
    f_pad = _round_up(n_feature, 128)
    n_output = w3.shape[1]
    out_pad = _round_up(n_output, 128)

    def pad2(a, r, c):
        return jnp.pad(a, ((0, r - a.shape[0]), (0, c - a.shape[1])))

    w1p = pad2(w1, f_pad, H1_PAD).astype(jnp.bfloat16)
    w2p = pad2(w2, H1_PAD, H2_PAD).astype(jnp.bfloat16)
    w3p = pad2(w3, H2_PAD, out_pad).astype(jnp.bfloat16)
    b1p = pad2(b1, 1, H1_PAD)            # biases stay f32 (VPU epilogue)
    b2p = pad2(b2, 1, H2_PAD)
    b3p = pad2(b3, 1, out_pad)
    return (w1p, b1p, w2p, b2p, w3p, b3p)


@functools.partial(jax.jit, static_argnames=("n_output", "tile_b"))
def net4_forward(x, padded_params, *, n_output, tile_b=512):
    """Fused forward pass of Net_4. x: [B, n_feature] float32."""
    w1, b1, w2, b2, w3, b3 = padded_params
    B, n_feature = x.shape
    f_pad = w1.shape[0]
    out_pad = w3.shape[1]

    # Batch tile: large enough to amortize per-step overhead, multiple of 16
    # (bf16 sublane packing); sized well inside v7x's 32 MiB scoped VMEM.
    tb = min(tile_b, _round_up(B, 16))
    b_pad = _round_up(B, tb)

    # Pad x (zeros) to [b_pad, f_pad] and cast to bf16 for the MXU.
    x_p = jnp.pad(x, ((0, b_pad - B), (0, f_pad - n_feature))).astype(jnp.bfloat16)

    grid = (b_pad // tb,)
    const = lambda i: (0, 0)   # weights/biases: resident, same block every step

    flops = 2 * b_pad * (f_pad * H1_PAD + H1_PAD * H2_PAD + H2_PAD * out_pad)
    bytes_accessed = (x_p.size * 2 + b_pad * out_pad * 4
                      + sum(int(a.size) * a.dtype.itemsize
                            for a in (w1, b1, w2, b2, w3, b3)))

    out = pl.pallas_call(
        _net4_kernel,
        out_shape=jax.ShapeDtypeStruct((b_pad, out_pad), jnp.float32),
        grid_spec=pltpu.PrefetchScalarGridSpec(
            num_scalar_prefetch=0,
            grid=grid,
            in_specs=[
                pl.BlockSpec((tb, f_pad), lambda i: (i, 0)),   # x: streamed
                pl.BlockSpec((f_pad, H1_PAD), const),          # w1
                pl.BlockSpec((1, H1_PAD), const),              # b1
                pl.BlockSpec((H1_PAD, H2_PAD), const),         # w2
                pl.BlockSpec((1, H2_PAD), const),              # b2
                pl.BlockSpec((H2_PAD, out_pad), const),        # w3
                pl.BlockSpec((1, out_pad), const),             # b3
            ],
            out_specs=pl.BlockSpec((tb, out_pad), lambda i: (i, 0)),
        ),
        compiler_params=pltpu.CompilerParams(
            dimension_semantics=("parallel",),   # shard batch across TCs (v7x)
        ),
        cost_estimate=pl.CostEstimate(
            flops=flops, transcendentals=0, bytes_accessed=bytes_accessed),
    )(x_p, w1, b1, w2, b2, w3, b3)

    return out[:B, :n_output]


def init_params(key, n_feature, n_output):
    """Deterministic synthetic init (PyTorch-like uniform fan-in scaling)."""
    def linear(key, fan_in, fan_out):
        kw, kb = jax.random.split(key)
        bound = 1.0 / jnp.sqrt(jnp.float32(fan_in))
        w = jax.random.uniform(kw, (fan_in, fan_out), jnp.float32, -bound, bound)
        b = jax.random.uniform(kb, (1, fan_out), jnp.float32, -bound, bound)
        return w, b

    k1, k2, k3 = jax.random.split(key, 3)
    w1, b1 = linear(k1, n_feature, 160)
    w2, b2 = linear(k2, 160, 100)
    w3, b3 = linear(k3, 100, n_output)
    return (w1, b1, w2, b2, w3, b3)


def net4_reference(x, params):
    w1, b1, w2, b2, w3, b3 = params
    h1 = jnp.maximum(x @ w1 + b1, 0.0)
    h2 = jnp.maximum(h1 @ w2 + b2, 0.0)
    return h2 @ w3 + b3


if __name__ == "__main__":
    # TODO(synk): training-mode Dropout (mask + 2x scaling via pltpu.prng_*) is
    # intentionally omitted; inference-mode (identity) semantics are implemented.
    n_feature, n_output, batch = 32, 10, 8

    key = jax.random.PRNGKey(0)
    k_x, k_p = jax.random.split(key)
    x = jax.random.normal(k_x, (batch, n_feature), jnp.float32)
    params = init_params(k_p, n_feature, n_output)
    padded_params = prepare_params(params, n_feature)

    out = net4_forward(x, padded_params, n_output=n_output)
    out = jax.block_until_ready(out)

    ref = net4_reference(x, params)  # f32 reference; kernel uses bf16 dot inputs
    assert out.shape == (batch, n_output)
    assert jnp.allclose(out, ref, atol=2e-2, rtol=2e-2), "mismatch vs reference"

    print("KERNEL_OK")
</pallas_src>

<mosaic_0001>
module attributes {stable_mosaic.version = 11 : i64} {
  func.func @_net4_kernel(%arg0: i32, %arg1: memref<16x128xbf16, #tpu.memory_space<vmem>>, %arg2: memref<128x256xbf16, #tpu.memory_space<vmem>>, %arg3: memref<1x256xf32, #tpu.memory_space<vmem>>, %arg4: memref<256x128xbf16, #tpu.memory_space<vmem>>, %arg5: memref<1x128xf32, #tpu.memory_space<vmem>>, %arg6: memref<128x128xbf16, #tpu.memory_space<vmem>>, %arg7: memref<1x128xf32, #tpu.memory_space<vmem>>, %arg8: memref<16x128xf32, #tpu.memory_space<vmem>>) attributes {dimension_semantics = [#tpu.dimension_semantics<parallel>], iteration_bounds = array<i64: 1>, scalar_prefetch = 0 : i64, scratch_operands = 0 : i64, tpu.core_type = #tpu.core_type<tc>, window_params = [{transform_indices = @transform_0, window_bounds = array<i64: 16, 128>}, {pipeline_mode = #tpu.pipeline_mode<synchronous>, transform_indices = @transform_1, window_bounds = array<i64: 128, 256>}, {pipeline_mode = #tpu.pipeline_mode<synchronous>, transform_indices = @transform_2, window_bounds = array<i64: 1, 256>}, {pipeline_mode = #tpu.pipeline_mode<synchronous>, transform_indices = @transform_3, window_bounds = array<i64: 256, 128>}, {pipeline_mode = #tpu.pipeline_mode<synchronous>, transform_indices = @transform_4, window_bounds = array<i64: 1, 128>}, {pipeline_mode = #tpu.pipeline_mode<synchronous>, transform_indices = @transform_5, window_bounds = array<i64: 128, 128>}, {pipeline_mode = #tpu.pipeline_mode<synchronous>, transform_indices = @transform_6, window_bounds = array<i64: 1, 128>}, {transform_indices = @transform_7, window_bounds = array<i64: 16, 128>}]} {
    %c0 = arith.constant 0 : index
    %c0_0 = arith.constant 0 : index
    %0 = vector.load %arg1[%c0, %c0_0] : memref<16x128xbf16, #tpu.memory_space<vmem>>, vector<16x128xbf16>
    %c0_1 = arith.constant 0 : index
    %c0_2 = arith.constant 0 : index
    %1 = vector.load %arg2[%c0_1, %c0_2] : memref<128x256xbf16, #tpu.memory_space<vmem>>, vector<128x256xbf16>
    %cst = arith.constant dense<0.000000e+00> : vector<16x256xf32>
    %2 = tpu.matmul %0, %1, %cst {dimension_numbers = #tpu.dot_dimension_numbers<[1], [0], [0], [1], [0, 0, 1, 1], [], []>} : vector<16x128xbf16>, vector<128x256xbf16>, vector<16x256xf32> -> vector<16x256xf32>
    %c0_3 = arith.constant 0 : index
    %c0_4 = arith.constant 0 : index
    %3 = vector.load %arg3[%c0_3, %c0_4] : memref<1x256xf32, #tpu.memory_space<vmem>>, vector<1x256xf32>
    %4 = vector.broadcast %3 : vector<1x256xf32> to vector<16x256xf32>
    %5 = arith.addf %2, %4 : vector<16x256xf32>
    %cst_5 = arith.constant 0.000000e+00 : f32
    %6 = vector.broadcast %cst_5 : f32 to vector<16x256xf32>
    %7 = arith.maximumf %5, %6 : vector<16x256xf32>
    %8 = arith.truncf %7 : vector<16x256xf32> to vector<16x256xbf16>
    %c0_6 = arith.constant 0 : index
    %c0_7 = arith.constant 0 : index
    %9 = vector.load %arg4[%c0_6, %c0_7] : memref<256x128xbf16, #tpu.memory_space<vmem>>, vector<256x128xbf16>
    %cst_8 = arith.constant dense<0.000000e+00> : vector<16x128xf32>
    %10 = tpu.matmul %8, %9, %cst_8 {dimension_numbers = #tpu.dot_dimension_numbers<[1], [0], [0], [1], [0, 0, 1, 1], [], []>} : vector<16x256xbf16>, vector<256x128xbf16>, vector<16x128xf32> -> vector<16x128xf32>
    %c0_9 = arith.constant 0 : index
    %c0_10 = arith.constant 0 : index
    %11 = vector.load %arg5[%c0_9, %c0_10] : memref<1x128xf32, #tpu.memory_space<vmem>>, vector<1x128xf32>
    %12 = vector.broadcast %11 : vector<1x128xf32> to vector<16x128xf32>
    %13 = arith.addf %10, %12 : vector<16x128xf32>
    %cst_11 = arith.constant 0.000000e+00 : f32
    %14 = vector.broadcast %cst_11 : f32 to vector<16x128xf32>
    %15 = arith.maximumf %13, %14 : vector<16x128xf32>
    %16 = arith.truncf %15 : vector<16x128xf32> to vector<16x128xbf16>
    %c0_12 = arith.constant 0 : index
    %c0_13 = arith.constant 0 : index
    %17 = vector.load %arg6[%c0_12, %c0_13] : memref<128x128xbf16, #tpu.memory_space<vmem>>, vector<128x128xbf16>
    %cst_14 = arith.constant dense<0.000000e+00> : vector<16x128xf32>
    %18 = tpu.matmul %16, %17, %cst_14 {dimension_numbers = #tpu.dot_dimension_numbers<[1], [0], [0], [1], [0, 0, 1, 1], [], []>} : vector<16x128xbf16>, vector<128x128xbf16>, vector<16x128xf32> -> vector<16x128xf32>
    %c0_15 = arith.constant 0 : index
    %c0_16 = arith.constant 0 : index
    %19 = vector.load %arg7[%c0_15, %c0_16] : memref<1x128xf32, #tpu.memory_space<vmem>>, vector<1x128xf32>
    %20 = vector.broadcast %19 : vector<1x128xf32> to vector<16x128xf32>
    %21 = arith.addf %18, %20 : vector<16x128xf32>
    %c0_17 = arith.constant 0 : index
    %c0_18 = arith.constant 0 : index
    %22 = vector.load %arg8[%c0_17, %c0_18] : memref<16x128xf32, #tpu.memory_space<vmem>>, vector<16x128xf32>
    tpu.vector_store %arg8[%c0_17, %c0_18], %21 {strides = array<i32>} : memref<16x128xf32, #tpu.memory_space<vmem>>, vector<16x128xf32>,
    return
  }
  func.func @transform_0(%arg0: i32) -> (i32, i32) {
    %c0_i32 = arith.constant 0 : i32
    %c0_i32_0 = arith.constant 0 : i32
    return %arg0, %c0_i32 : i32, i32
  }
  func.func @transform_1(%arg0: i32) -> (i32, i32) {
    %c0_i32 = arith.constant 0 : i32
    %c0_i32_0 = arith.constant 0 : i32
    %c0_i32_1 = arith.constant 0 : i32
    return %c0_i32, %c0_i32_0 : i32, i32
  }
  func.func @transform_2(%arg0: i32) -> (i32, i32) {
    %c0_i32 = arith.constant 0 : i32
    %c0_i32_0 = arith.constant 0 : i32
    %c0_i32_1 = arith.constant 0 : i32
    return %c0_i32, %c0_i32_0 : i32, i32
  }
  func.func @transform_3(%arg0: i32) -> (i32, i32) {
    %c0_i32 = arith.constant 0 : i32
    %c0_i32_0 = arith.constant 0 : i32
    %c0_i32_1 = arith.constant 0 : i32
    return %c0_i32, %c0_i32_0 : i32, i32
  }
  func.func @transform_4(%arg0: i32) -> (i32, i32) {
    %c0_i32 = arith.constant 0 : i32
    %c0_i32_0 = arith.constant 0 : i32
    %c0_i32_1 = arith.constant 0 : i32
    return %c0_i32, %c0_i32_0 : i32, i32
  }
  func.func @transform_5(%arg0: i32) -> (i32, i32) {
    %c0_i32 = arith.constant 0 : i32
    %c0_i32_0 = arith.constant 0 : i32
    %c0_i32_1 = arith.constant 0 : i32
    return %c0_i32, %c0_i32_0 : i32, i32
  }
  func.func @transform_6(%arg0: i32) -> (i32, i32) {
    %c0_i32 = arith.constant 0 : i32
    %c0_i32_0 = arith.constant 0 : i32
    %c0_i32_1 = arith.constant 0 : i32
    return %c0_i32, %c0_i32_0 : i32, i32
  }
  func.func @transform_7(%arg0: i32) -> (i32, i32) {
    %c0_i32 = arith.constant 0 : i32
    %c0_i32_0 = arith.constant 0 : i32
    return %arg0, %c0_i32 : i32, i32
  }
}

</mosaic_0001>

<llo_original>
// kernel: net4_forward.1
$region0: #{net4_forward.1}
  #allocation0 [shape = 'u32[]', space=smem, size = 0x4, offset = 0x4, fixed_abs, tag = 'smem constant byte address 0x4 - core index']
  #allocation1 [shape = 'u32[144,128]{1,0:T(1,128)}', space=vmem, size = 0x12000, scoped, tag = 'internal scratch']
  %s0 = inlined_call_operand.vmem [shape: bf16[16,128], index: 0, kind: input, shape index: {}]
  %s1 = inlined_call_operand.hbm [shape: bf16[128,256], index: 1, kind: input, shape index: {}]
  %s2 = inlined_call_operand.vmem [shape: f32[1,256], index: 2, kind: input, shape index: {}]
  %s3 = inlined_call_operand.hbm [shape: bf16[256,128], index: 3, kind: input, shape index: {}]
  %s4 = inlined_call_operand.vmem [shape: f32[1,128], index: 4, kind: input, shape index: {}]
  %s5 = inlined_call_operand.hbm [shape: bf16[128,128], index: 5, kind: input, shape index: {}]
  %s6 = inlined_call_operand.vmem [shape: f32[1,128], index: 6, kind: input, shape index: {}]
  %s7 = inlined_call_operand.vmem [shape: f32[16,128], index: 7, kind: output, shape index: {}]
  %s8 = sld [smem:[#allocation0]]
  $region50: #{net4_forward.1} parent=0
    _
  %s10 = ssub.s32 1, %s8
  %s11 = scalar_select 0, %s10, %s8
  $region1: #{net4_forward.1} parent=0
    #allocation2 [shape = 'u8[65536]{0}', space=vmem, size = 0x10000, scoped, tag = 'input window, operand 1, single buffered']
    #allocation3 [shape = 's32[1]{0}', space=sflag, size = 0x4, scoped, tag = 'scoped memory for net4_forward.1']
    #allocation4 [shape = 'u8[65536]{0}', space=vmem, size = 0x10000, scoped, tag = 'input window, operand 3, single buffered']
    #allocation5 [shape = 's32[1]{0}', space=sflag, size = 0x4, scoped, tag = 'scoped memory for net4_forward.1']
    #allocation6 [shape = 'u8[32768]{0}', space=vmem, size = 0x8000, scoped, tag = 'input window, operand 5, single buffered']
    %12 = vsyncpa [#allocation3], 0
    %13 = vsyncpa [#allocation5], 0
    // Predicated region
    $region2: #{net4_forward.1} parent=1 // pred_check
      _
    $region3: #{net4_forward.1} parent=1 // pred_check_branch
      %15 = sbr.rel (0) target = $region5
    $region4: #{net4_forward.1} parent=1 // pred_region
      _
    $region5: #{net4_forward.1} parent=1 // pred_fallthru
      _
    // Predicated region
    $region6: #{net4_forward.1} parent=1 // pred_check
      _
    $region7: #{net4_forward.1} parent=1 // pred_check_branch
      %17 = sbr.rel (0) target = $region9
    $region8: #{net4_forward.1} parent=1 // pred_region
      %s19 = ssub.s32 2048, 2048
      %20 = vsyncadd [#allocation3], %s19
      %s21 = sshll.u32 [#allocation2], 4
      %s22 = int_to_ptr.vmem [resolvable:$true] %s21
      %27 = dma.hbm_to_vmem [thread:$0]  %s1, 2048, %s22, [#allocation3], 128, 128, 8
    $region9: #{net4_forward.1} parent=1 // pred_fallthru
      _
    // Predicated region
    $region10: #{net4_forward.1} parent=1 // pred_check
      _
    $region11: #{net4_forward.1} parent=1 // pred_check_branch
      %29 = sbr.rel (0) target = $region13
    $region12: #{net4_forward.1} parent=1 // pred_region
      _
    $region13: #{net4_forward.1} parent=1 // pred_fallthru
      _
    // Predicated region
    $region14: #{net4_forward.1} parent=1 // pred_check
      _
    $region15: #{net4_forward.1} parent=1 // pred_check_branch
      %31 = sbr.rel (0) target = $region17
    $region16: #{net4_forward.1} parent=1 // pred_region
      %s33 = ssub.s32 2048, 2048
      %34 = vsyncadd [#allocation5], %s33
      %s35 = sshll.u32 [#allocation4], 4
      %s36 = int_to_ptr.vmem [resolvable:$true] %s35
      %41 = dma.hbm_to_vmem [thread:$0]  %s3, 2048, %s36, [#allocation5], 64, 64, 4
    $region17: #{net4_forward.1} parent=1 // pred_fallthru
      _
    // Predicated region
    $region18: #{net4_forward.1} parent=1 // pred_check
      _
    $region19: #{net4_forward.1} parent=1 // pred_check_branch
      %43 = sbr.rel (0) target = $region21
    $region20: #{net4_forward.1} parent=1 // pred_region
      _
    $region21: #{net4_forward.1} parent=1 // pred_fallthru
      _
    // Predicated region
    $region22: #{net4_forward.1} parent=1 // pred_check
      _
    $region23: #{net4_forward.1} parent=1 // pred_check_branch
      %45 = sbr.rel (0) target = $region25
    $region24: #{net4_forward.1} parent=1 // pred_region
      %s47 = ssub.s32 1024, 1024
      %48 = vsyncadd [#allocation5], %s47
      %s49 = sshll.u32 [#allocation6], 4
      %s50 = int_to_ptr.vmem [resolvable:$true] %s49
      %55 = dma.hbm_to_vmem [thread:$0]  %s5, 1024, %s50, [#allocation5], 64, 64, 4
    $region25: #{net4_forward.1} parent=1 // pred_fallthru
      _
    // Predicated region
    $region26: #{net4_forward.1} parent=1 // pred_check
      _
    $region27: #{net4_forward.1} parent=1 // pred_check_branch
      %57 = sbr.rel (0) target = $region29
    $region28: #{net4_forward.1} parent=1 // pred_region
      _
    $region29: #{net4_forward.1} parent=1 // pred_fallthru
      _
    // Predicated region
    $region30: #{net4_forward.1} parent=1 // pred_check
      _
    $region31: #{net4_forward.1} parent=1 // pred_check_branch
      %59 = sbr.rel (0) target = $region33
    $region32: #{net4_forward.1} parent=1 // pred_region
      %60 = dma.done [#allocation3], 2048
    $region33: #{net4_forward.1} parent=1 // pred_fallthru
      _
    // Predicated region
    $region34: #{net4_forward.1} parent=1 // pred_check
      _
    $region35: #{net4_forward.1} parent=1 // pred_check_branch
      %62 = sbr.rel (0) target = $region37
    $region36: #{net4_forward.1} parent=1 // pred_region
      %63 = dma.done [#allocation5], 2048
    $region37: #{net4_forward.1} parent=1 // pred_fallthru
      _
    // Predicated region
    $region38: #{net4_forward.1} parent=1 // pred_check
      _
    $region39: #{net4_forward.1} parent=1 // pred_check_branch
      %65 = sbr.rel (0) target = $region41
    $region40: #{net4_forward.1} parent=1 // pred_region
      %66 = dma.done [#allocation5], 1024
    $region41: #{net4_forward.1} parent=1 // pred_fallthru
      _
    %v68 = vld [vmem:[%s0] sm:$0xf]
    %v69 = vld [vmem:[%s0 + $0x4] sm:$0xf]
    %v70 = vld [vmem:[#allocation2] sm:$0xff]
    %v71 = vld [vmem:[#allocation2 + $0x8] sm:$0xff]
    %v72 = vld [vmem:[#allocation2 + $0x10] sm:$0xff]
    %v73 = vld [vmem:[#allocation2 + $0x18] sm:$0xff]
    %v74 = vld [vmem:[#allocation2 + $0x20] sm:$0xff]
    %v75 = vld [vmem:[#allocation2 + $0x28] sm:$0xff]
    %v76 = vld [vmem:[#allocation2 + $0x30] sm:$0xff]
    %v77 = vld [vmem:[#allocation2 + $0x38] sm:$0xff]
    %v78 = vld [vmem:[#allocation2 + $0x40] sm:$0xff]
    %v79 = vld [vmem:[#allocation2 + $0x48] sm:$0xff]
    %v80 = vld [vmem:[#allocation2 + $0x50] sm:$0xff]
    %v81 = vld [vmem:[#allocation2 + $0x58] sm:$0xff]
    %v82 = vld [vmem:[#allocation2 + $0x60] sm:$0xff]
    %v83 = vld [vmem:[#allocation2 + $0x68] sm:$0xff]
    %v84 = vld [vmem:[#allocation2 + $0x70] sm:$0xff]
    %v85 = vld [vmem:[#allocation2 + $0x78] sm:$0xff]
    %v86 = vld [vmem:[%s2] sm:$0x3]
    %v88 = vlaneseq
    %v89 = vshrl.u32 %v88, 7
    %v90 = vsub.s32 0, %v89
    %v91 = vrot.slane %v86, %v90
    %v92 = vlaneseq
    %v93 = vshrl.u32 %v92, 7
    %v94 = vsub.s32 1, %v93
    %v95 = vrot.slane %v86, %v94
    %v100 = vunpack.c.l.b16 %v68
    %v101 = vunpack.c.l.b16 %v69
    %v102 = vpack.c.b16 %v101, %v100
    %v120 = vunpack.c.l.b16 %v70
    %v121 = vunpack.c.h.b16 %v70
    %v122 = vunpack.c.l.b16 %v71
    %v123 = vunpack.c.h.b16 %v71
    %v124 = vunpack.c.l.b16 %v72
    %v125 = vunpack.c.h.b16 %v72
    %v126 = vunpack.c.l.b16 %v73
    %v127 = vunpack.c.h.b16 %v73
    %v128 = vunpack.c.l.b16 %v74
    %v129 = vunpack.c.h.b16 %v74
    %v130 = vunpack.c.l.b16 %v75
    %v131 = vunpack.c.h.b16 %v75
    %v132 = vunpack.c.l.b16 %v76
    %v133 = vunpack.c.h.b16 %v76
    %v134 = vunpack.c.l.b16 %v77
    %v135 = vunpack.c.h.b16 %v77
    %v136 = vunpack.c.l.b16 %v78
    %v137 = vunpack.c.h.b16 %v78
    %v138 = vunpack.c.l.b16 %v79
    %v139 = vunpack.c.h.b16 %v79
    %v140 = vunpack.c.l.b16 %v80
    %v141 = vunpack.c.h.b16 %v80
    %v142 = vunpack.c.l.b16 %v81
    %v143 = vunpack.c.h.b16 %v81
    %v144 = vunpack.c.l.b16 %v82
    %v145 = vunpack.c.h.b16 %v82
    %v146 = vunpack.c.l.b16 %v83
    %v147 = vunpack.c.h.b16 %v83
    %v148 = vunpack.c.l.b16 %v84
    %v149 = vunpack.c.h.b16 %v84
    %v150 = vunpack.c.l.b16 %v85
    %v151 = vunpack.c.h.b16 %v85
    %v152 = vpack.c.b16 %v122, %v120
    %v153 = vpack.c.b16 %v123, %v121
    %v154 = vpack.c.b16 %v126, %v124
    %v155 = vpack.c.b16 %v127, %v125
    %v156 = vpack.c.b16 %v130, %v128
    %v157 = vpack.c.b16 %v131, %v129
    %v158 = vpack.c.b16 %v134, %v132
    %v159 = vpack.c.b16 %v135, %v133
    %v160 = vpack.c.b16 %v138, %v136
    %v161 = vpack.c.b16 %v139, %v137
    %v162 = vpack.c.b16 %v142, %v140
    %v163 = vpack.c.b16 %v143, %v141
    %v164 = vpack.c.b16 %v146, %v144
    %v165 = vpack.c.b16 %v147, %v145
    %v166 = vpack.c.b16 %v150, %v148
    %v167 = vpack.c.b16 %v151, %v149
    %184 = vmatprep.subr.bf16.mxu0 %v153
    %185 = vmatpush1.bf16.msra.mxu0 %v152
    %186 = vmatprep.subr.bf16.mxu0 %v155
    %187 = vmatpush1.bf16.msra.mxu0 %v154
    %188 = vmatprep.subr.bf16.mxu0 %v157
    %189 = vmatpush1.bf16.msra.mxu0 %v156
    %190 = vmatprep.subr.bf16.mxu0 %v159
    %191 = vmatpush1.bf16.msra.mxu0 %v158
    %192 = vmatprep.subr.bf16.mxu0 %v161
    %193 = vmatpush1.bf16.msra.mxu0 %v160
    %194 = vmatprep.subr.bf16.mxu0 %v163
    %195 = vmatpush1.bf16.msra.mxu0 %v162
    %196 = vmatprep.subr.bf16.mxu0 %v165
    %197 = vmatpush1.bf16.msra.mxu0 %v164
    %198 = vmatprep.subr.bf16.mxu0 %v167
    %199 = vmatpush1.bf16.msra.mxu0 %v166
    %200 = vmatprep.subr.bf16.mxu0 0
    %201 = vmatpush1.bf16.msra.mxu0 0
    %202 = vmatprep.subr.bf16.mxu0 0
    %203 = vmatpush1.bf16.msra.mxu0 0
    %204 = vmatprep.subr.bf16.mxu0 0
    %205 = vmatpush1.bf16.msra.mxu0 0
    %206 = vmatprep.subr.bf16.mxu0 0
    %207 = vmatpush1.bf16.msra.mxu0 0
    %208 = vmatprep.subr.bf16.mxu0 0
    %209 = vmatpush1.bf16.msra.mxu0 0
    %210 = vmatprep.subr.bf16.mxu0 0
    %211 = vmatpush1.bf16.msra.mxu0 0
    %212 = vmatprep.subr.bf16.mxu0 0
    %213 = vmatpush1.bf16.msra.mxu0 0
    %214 = vmatprep.subr.bf16.mxu0 0
    %215 = vmatpush1.bf16.msra.mxu0 0
    %216 = vmatprep.mubr.bf16.mxu0 0
    %217 = vmatmul.mubr.bf16.gmra.mrb[0].mxu0 %v102
    %v218 = vpop.f32.mrb[0].mxu0
    %v219 = vadd.f32 %v91, %v218
    %v220 = vpop.f32.mrb[0].mxu0
    %v221 = vadd.f32 %v95, %v220
    %v222 = vpop.f32.mrb[0].mxu0
    %v223 = vadd.f32 %v91, %v222
    %v224 = vpop.f32.mrb[0].mxu0
    %v225 = vadd.f32 %v95, %v224
    %226 = vdwg.mxu0
    %v227 = vmax.f32 %v219, 0.0
    %v228 = vmax.f32 %v221, 0.0
    %v229 = vmax.f32 %v223, 0.0
    %v230 = vmax.f32 %v225, 0.0
    %v231 = vpack.c.bf16 %v229, %v227
    %v232 = vpack.c.bf16 %v230, %v228
    %v233 = vld [vmem:[#allocation4] sm:$0xf]
    %v234 = vld [vmem:[#allocation4 + $0x4] sm:$0xf]
    %v235 = vld [vmem:[#allocation4 + $0x8] sm:$0xf]
    %v236 = vld [vmem:[#allocation4 + $0xc] sm:$0xf]
    %v237 = vld [vmem:[#allocation4 + $0x10] sm:$0xf]
    %v238 = vld [vmem:[#allocation4 + $0x14] sm:$0xf]
    %v239 = vld [vmem:[#allocation4 + $0x18] sm:$0xf]
    %v240 = vld [vmem:[#allocation4 + $0x1c] sm:$0xf]
    %v241 = vld [vmem:[#allocation4 + $0x20] sm:$0xf]
    %v242 = vld [vmem:[#allocation4 + $0x24] sm:$0xf]
    %v243 = vld [vmem:[#allocation4 + $0x28] sm:$0xf]
    %v244 = vld [vmem:[#allocation4 + $0x2c] sm:$0xf]
    %v245 = vld [vmem:[#allocation4 + $0x30] sm:$0xf]
    %v246 = vld [vmem:[#allocation4 + $0x34] sm:$0xf]
    %v247 = vld [vmem:[#allocation4 + $0x38] sm:$0xf]
    %v248 = vld [vmem:[#allocation4 + $0x3c] sm:$0xf]
    %v249 = vld [vmem:[#allocation4 + $0x40] sm:$0xf]
    %v250 = vld [vmem:[#allocation4 + $0x44] sm:$0xf]
    %v251 = vld [vmem:[#allocation4 + $0x48] sm:$0xf]
    %v252 = vld [vmem:[#allocation4 + $0x4c] sm:$0xf]
    %v253 = vld [vmem:[#allocation4 + $0x50] sm:$0xf]
    %v254 = vld [vmem:[#allocation4 + $0x54] sm:$0xf]
    %v255 = vld [vmem:[#allocation4 + $0x58] sm:$0xf]
    %v256 = vld [vmem:[#allocation4 + $0x5c] sm:$0xf]
    %v257 = vld [vmem:[#allocation4 + $0x60] sm:$0xf]
    %v258 = vld [vmem:[#allocation4 + $0x64] sm:$0xf]
    %v259 = vld [vmem:[#allocation4 + $0x68] sm:$0xf]
    %v260 = vld [vmem:[#allocation4 + $0x6c] sm:$0xf]
    %v261 = vld [vmem:[#allocation4 + $0x70] sm:$0xf]
    %v262 = vld [vmem:[#allocation4 + $0x74] sm:$0xf]
    %v263 = vld [vmem:[#allocation4 + $0x78] sm:$0xf]
    %v264 = vld [vmem:[#allocation4 + $0x7c] sm:$0xf]
    %v265 = vld [vmem:[%s4] sm:$0x1]
    %v267 = vlaneseq
    %v268 = vshrl.u32 %v267, 7
    %v269 = vsub.s32 0, %v268
    %v270 = vrot.slane %v265, %v269
    %v304 = vunpack.c.l.b16 %v233
    %v305 = vunpack.c.l.b16 %v234
    %v306 = vunpack.c.l.b16 %v235
    %v307 = vunpack.c.l.b16 %v236
    %v308 = vunpack.c.l.b16 %v237
    %v309 = vunpack.c.l.b16 %v238
    %v310 = vunpack.c.l.b16 %v239
    %v311 = vunpack.c.l.b16 %v240
    %v312 = vunpack.c.l.b16 %v241
    %v313 = vunpack.c.l.b16 %v242
    %v314 = vunpack.c.l.b16 %v243
    %v315 = vunpack.c.l.b16 %v244
    %v316 = vunpack.c.l.b16 %v245
    %v317 = vunpack.c.l.b16 %v246
    %v318 = vunpack.c.l.b16 %v247
    %v319 = vunpack.c.l.b16 %v248
    %v320 = vunpack.c.l.b16 %v249
    %v321 = vunpack.c.l.b16 %v250
    %v322 = vunpack.c.l.b16 %v251
    %v323 = vunpack.c.l.b16 %v252
    %v324 = vunpack.c.l.b16 %v253
    %v325 = vunpack.c.l.b16 %v254
    %v326 = vunpack.c.l.b16 %v255
    %v327 = vunpack.c.l.b16 %v256
    %v328 = vunpack.c.l.b16 %v257
    %v329 = vunpack.c.l.b16 %v258
    %v330 = vunpack.c.l.b16 %v259
    %v331 = vunpack.c.l.b16 %v260
    %v332 = vunpack.c.l.b16 %v261
    %v333 = vunpack.c.l.b16 %v262
    %v334 = vunpack.c.l.b16 %v263
    %v335 = vunpack.c.l.b16 %v264
    %v336 = vpack.c.b16 %v305, %v304
    %v337 = vpack.c.b16 %v307, %v306
    %v338 = vpack.c.b16 %v309, %v308
    %v339 = vpack.c.b16 %v311, %v310
    %v340 = vpack.c.b16 %v313, %v312
    %v341 = vpack.c.b16 %v315, %v314
    %v342 = vpack.c.b16 %v317, %v316
    %v343 = vpack.c.b16 %v319, %v318
    %v344 = vpack.c.b16 %v321, %v320
    %v345 = vpack.c.b16 %v323, %v322
    %v346 = vpack.c.b16 %v325, %v324
    %v347 = vpack.c.b16 %v327, %v326
    %v348 = vpack.c.b16 %v329, %v328
    %v349 = vpack.c.b16 %v331, %v330
    %v350 = vpack.c.b16 %v333, %v332
    %v351 = vpack.c.b16 %v335, %v334
    %368 = vmatprep.subr.bf16.mxu0 0
    %369 = vmatpush1.bf16.msra.mxu0 %v336
    %370 = vmatprep.subr.bf16.mxu0 0
    %371 = vmatpush1.bf16.msra.mxu0 %v337
    %372 = vmatprep.subr.bf16.mxu0 0
    %373 = vmatpush1.bf16.msra.mxu0 %v338
    %374 = vmatprep.subr.bf16.mxu0 0
    %375 = vmatpush1.bf16.msra.mxu0 %v339
    %376 = vmatprep.subr.bf16.mxu0 0
    %377 = vmatpush1.bf16.msra.mxu0 %v340
    %378 = vmatprep.subr.bf16.mxu0 0
    %379 = vmatpush1.bf16.msra.mxu0 %v341
    %380 = vmatprep.subr.bf16.mxu0 0
    %381 = vmatpush1.bf16.msra.mxu0 %v342
    %382 = vmatprep.subr.bf16.mxu0 0
    %383 = vmatpush1.bf16.msra.mxu0 %v343
    %384 = vmatprep.subr.bf16.mxu0 0
    %385 = vmatpush1.bf16.msra.mxu0 %v344
    %386 = vmatprep.subr.bf16.mxu0 0
    %387 = vmatpush1.bf16.msra.mxu0 %v345
    %388 = vmatprep.subr.bf16.mxu0 0
    %389 = vmatpush1.bf16.msra.mxu0 %v346
    %390 = vmatprep.subr.bf16.mxu0 0
    %391 = vmatpush1.bf16.msra.mxu0 %v347
    %392 = vmatprep.subr.bf16.mxu0 0
    %393 = vmatpush1.bf16.msra.mxu0 %v348
    %394 = vmatprep.subr.bf16.mxu0 0
    %395 = vmatpush1.bf16.msra.mxu0 %v349
    %396 = vmatprep.subr.bf16.mxu0 0
    %397 = vmatpush1.bf16.msra.mxu0 %v350
    %398 = vmatprep.subr.bf16.mxu0 0
    %399 = vmatpush1.bf16.msra.mxu0 %v351
    %400 = vmatprep.mubr.bf16.mxu0 %v232
    %401 = vmatmul.mubr.bf16.gmra.mrb[0].mxu0 %v231
    %v402 = vpop.f32.mrb[0].mxu0
    %v403 = vadd.f32 %v270, %v402
    %v404 = vpop.f32.mrb[0].mxu0
    %v405 = vpop.f32.mrb[0].mxu0
    %v406 = vadd.f32 %v270, %v405
    %v407 = vpop.f32.mrb[0].mxu0
    %408 = vdwg.mxu0
    %v409 = vmax.f32 %v403, 0.0
    %v410 = vmax.f32 %v406, 0.0
    %v411 = vpack.c.bf16 %v410, %v409
    %v412 = vld [vmem:[#allocation6] sm:$0xf]
    %v413 = vld [vmem:[#allocation6 + $0x4] sm:$0xf]
    %v414 = vld [vmem:[#allocation6 + $0x8] sm:$0xf]
    %v415 = vld [vmem:[#allocation6 + $0xc] sm:$0xf]
    %v416 = vld [vmem:[#allocation6 + $0x10] sm:$0xf]
    %v417 = vld [vmem:[#allocation6 + $0x14] sm:$0xf]
    %v418 = vld [vmem:[#allocation6 + $0x18] sm:$0xf]
    %v419 = vld [vmem:[#allocation6 + $0x1c] sm:$0xf]
    %v420 = vld [vmem:[#allocation6 + $0x20] sm:$0xf]
    %v421 = vld [vmem:[#allocation6 + $0x24] sm:$0xf]
    %v422 = vld [vmem:[#allocation6 + $0x28] sm:$0xf]
    %v423 = vld [vmem:[#allocation6 + $0x2c] sm:$0xf]
    %v424 = vld [vmem:[#allocation6 + $0x30] sm:$0xf]
    %v425 = vld [vmem:[#allocation6 + $0x34] sm:$0xf]
    %v426 = vld [vmem:[#allocation6 + $0x38] sm:$0xf]
    %v427 = vld [vmem:[#allocation6 + $0x3c] sm:$0xf]
    %v428 = vld [vmem:[%s6] sm:$0x1]
    %v430 = vlaneseq
    %v431 = vshrl.u32 %v430, 7
    %v432 = vsub.s32 0, %v431
    %v433 = vrot.slane %v428, %v432
    %v451 = vunpack.c.l.b16 %v412
    %v452 = vunpack.c.l.b16 %v413
    %v453 = vunpack.c.l.b16 %v414
    %v454 = vunpack.c.l.b16 %v415
    %v455 = vunpack.c.l.b16 %v416
    %v456 = vunpack.c.l.b16 %v417
    %v457 = vunpack.c.l.b16 %v418
    %v458 = vunpack.c.l.b16 %v419
    %v459 = vunpack.c.l.b16 %v420
    %v460 = vunpack.c.l.b16 %v421
    %v461 = vunpack.c.l.b16 %v422
    %v462 = vunpack.c.l.b16 %v423
    %v463 = vunpack.c.l.b16 %v424
    %v464 = vunpack.c.l.b16 %v425
    %v465 = vunpack.c.l.b16 %v426
    %v466 = vunpack.c.l.b16 %v427
    %v467 = vpack.c.b16 %v452, %v451
    %v468 = vpack.c.b16 %v454, %v453
    %v469 = vpack.c.b16 %v456, %v455
    %v470 = vpack.c.b16 %v458, %v457
    %v471 = vpack.c.b16 %v460, %v459
    %v472 = vpack.c.b16 %v462, %v461
    %v473 = vpack.c.b16 %v464, %v463
    %v474 = vpack.c.b16 %v466, %v465
    %483 = vmatprep.subr.bf16.mxu0 0
    %484 = vmatpush1.bf16.msra.mxu0 %v467
    %485 = vmatprep.subr.bf16.mxu0 0
    %486 = vmatpush1.bf16.msra.mxu0 %v468
    %487 = vmatprep.subr.bf16.mxu0 0
    %488 = vmatpush1.bf16.msra.mxu0 %v469
    %489 = vmatprep.subr.bf16.mxu0 0
    %490 = vmatpush1.bf16.msra.mxu0 %v470
    %491 = vmatprep.subr.bf16.mxu0 0
    %492 = vmatpush1.bf16.msra.mxu0 %v471
    %493 = vmatprep.subr.bf16.mxu0 0
    %494 = vmatpush1.bf16.msra.mxu0 %v472
    %495 = vmatprep.subr.bf16.mxu0 0
    %496 = vmatpush1.bf16.msra.mxu0 %v473
    %497 = vmatprep.subr.bf16.mxu0 0
    %498 = vmatpush1.bf16.msra.mxu0 %v474
    %499 = vmatprep.subr.bf16.mxu0 0
    %500 = vmatpush1.bf16.msra.mxu0 0
    %501 = vmatprep.subr.bf16.mxu0 0
    %502 = vmatpush1.bf16.msra.mxu0 0
    %503 = vmatprep.subr.bf16.mxu0 0
    %504 = vmatpush1.bf16.msra.mxu0 0
    %505 = vmatprep.subr.bf16.mxu0 0
    %506 = vmatpush1.bf16.msra.mxu0 0
    %507 = vmatprep.subr.bf16.mxu0 0
    %508 = vmatpush1.bf16.msra.mxu0 0
    %509 = vmatprep.subr.bf16.mxu0 0
    %510 = vmatpush1.bf16.msra.mxu0 0
    %511 = vmatprep.subr.bf16.mxu0 0
    %512 = vmatpush1.bf16.msra.mxu0 0
    %513 = vmatprep.subr.bf16.mxu0 0
    %514 = vmatpush1.bf16.msra.mxu0 0
    %515 = vmatprep.mubr.bf16.mxu0 0
    %516 = vmatmul.mubr.bf16.gmra.mrb[0].mxu0 %v411
    %v517 = vpop.f32.mrb[0].mxu0
    %v518 = vadd.f32 %v433, %v517
    %v519 = vpop.f32.mrb[0].mxu0
    %v520 = vpop.f32.mrb[0].mxu0
    %v521 = vadd.f32 %v433, %v520
    %v522 = vpop.f32.mrb[0].mxu0
    %523 = vdwg.mxu0
    %524 = vst [vmem:[%s7] sm:$0xff] %v518
    %525 = vst [vmem:[%s7 + $0x8] sm:$0xff] %v521
    // Predicated region
    $region42: #{net4_forward.1} parent=1 // pred_check
      _
    $region43: #{net4_forward.1} parent=1 // pred_check_branch
      %527 = sbr.rel (0) target = $region45
    $region44: #{net4_forward.1} parent=1 // pred_region
      _
    $region45: #{net4_forward.1} parent=1 // pred_fallthru
      _
    // Predicated region
    $region46: #{net4_forward.1} parent=1 // pred_check
      _
    $region47: #{net4_forward.1} parent=1 // pred_check_branch
      %529 = sbr.rel (0) target = $region49
    $region48: #{net4_forward.1} parent=1 // pred_region
      _
    $region49: #{net4_forward.1} parent=1 // pred_fallthru
      _
    %530 = vsyncpa [#allocation3], 1
    %531 = vsyncpa [#allocation5], 1

</llo_original>
